<compile_context>
chip_gen: v7x
topology: tpu7x:2x2x1
jax: 0.10.0
libtpu: 0.0.40
codegen_flags: <defaults>
</compile_context>

<pallas_src>
import jax
import jax.numpy as jnp
from jax.experimental import pallas as pl
from jax.experimental.pallas import tpu as pltpu


def _color_mlp_kernel(x_ref, w1_ref, b1_ref, w2_ref, b2_ref, o_ref):
    # Two bf16 MXU matmuls (f32 accumulate) + bias + ReLU + sigmoid, all resident
    # in VMEM for the current (lane-packed) row tile.
    x = x_ref[...].astype(jnp.bfloat16)                         # (tile_rows, 128)
    h = jnp.dot(x, w1_ref[...],
                preferred_element_type=jnp.float32) + b1_ref[...]
    h = jnp.maximum(h, 0.0)                                     # ReLU (f32)
    y = jnp.dot(h.astype(jnp.bfloat16), w2_ref[...],
                preferred_element_type=jnp.float32) + b2_ref[...]
    o_ref[...] = jax.nn.sigmoid(y).astype(o_ref.dtype)          # sigmoid in f32


def color_mlp(x, w1, b1, w2, b2, *, tile_n=8192, out_dtype=None,
              vmem_limit_bytes=None):
    """x: (N, in_dim); w1: (in_dim, hidden); b1: (1, hidden) or (hidden,);
       w2: (hidden, out); b2: (1, out) or (out,).  Returns (N, out)."""
    N, in_dim = x.shape
    hidden = w1.shape[1]
    out_dim = w2.shape[1]
    out_dtype = out_dtype if out_dtype is not None else x.dtype

    # Fold `pack` consecutive rows into the 128-lane axis (block-diagonal weights).
    pack = 128 // in_dim if (in_dim <= 128 and 128 % in_dim == 0) else 1

    b1 = b1.reshape(1, -1)
    b2 = b2.reshape(1, -1)
    if pack > 1:
        eye = jnp.eye(pack, dtype=w1.dtype)
        w1 = jnp.kron(eye, w1)                       # (pack*in,  pack*hidden)
        w2 = jnp.kron(eye.astype(w2.dtype), w2)      # (pack*hid, pack*out)
        b1 = jnp.tile(b1, (1, pack))
        b2 = jnp.tile(b2, (1, pack))

    in_p, hid_p, out_p = pack * in_dim, pack * hidden, pack * out_dim

    # Packed-row tiling: multiple of 8 sublanes, no bigger than the padded batch.
    rows = pl.cdiv(N, pack)
    tile_rows = max(8, (int(tile_n) // pack // 8) * 8)
    tile_rows = min(tile_rows, ((rows + 7) // 8) * 8)
    n_blocks = pl.cdiv(rows, tile_rows)
    rows_padded = n_blocks * tile_rows
    N_padded = rows_padded * pack
    if N_padded != N:
        x = jnp.pad(x, ((0, N_padded - N), (0, 0)))   # padded rows are discarded
    x = x.reshape(rows_padded, in_p)                  # contiguous reshape (free)

    # Cast weights to bf16 once; biases stay f32 (added to the f32 accumulator).
    w1b = w1.astype(jnp.bfloat16)
    w2b = w2.astype(jnp.bfloat16)
    b1f = b1.astype(jnp.float32)
    b2f = b2.astype(jnp.float32)

    cp_kwargs = dict(dimension_semantics=("parallel",))
    if vmem_limit_bytes is not None:
        cp_kwargs["vmem_limit_bytes"] = vmem_limit_bytes

    out = pl.pallas_call(
        _color_mlp_kernel,
        out_shape=jax.ShapeDtypeStruct((rows_padded, out_p), out_dtype),
        grid_spec=pltpu.PrefetchScalarGridSpec(
            num_scalar_prefetch=0,
            grid=(n_blocks,),
            in_specs=[
                pl.BlockSpec((tile_rows, in_p), lambda i: (i, 0)),   # x tile
                pl.BlockSpec((in_p, hid_p), lambda i: (0, 0)),       # W1 (block-diag)
                pl.BlockSpec((1, hid_p), lambda i: (0, 0)),          # b1 (tiled)
                pl.BlockSpec((hid_p, out_p), lambda i: (0, 0)),      # W2 (block-diag)
                pl.BlockSpec((1, out_p), lambda i: (0, 0)),          # b2 (tiled)
            ],
            out_specs=pl.BlockSpec((tile_rows, out_p), lambda i: (i, 0)),
        ),
        compiler_params=pltpu.CompilerParams(**cp_kwargs),
    )(x, w1b, b1f, w2b, b2f)

    out = out.reshape(N_padded, out_dim)              # unpack lanes -> rows (free)
    return out[:N] if N_padded != N else out


def init_params(key, in_dim=32, hidden_dim=32, out_dim=3):
    """Deterministic init mimicking nn.Linear default (uniform +/- 1/sqrt(fan_in))."""
    k1, k2, k3, k4 = jax.random.split(key, 4)
    lim1 = 1.0 / jnp.sqrt(in_dim)
    lim2 = 1.0 / jnp.sqrt(hidden_dim)
    w1 = jax.random.uniform(k1, (in_dim, hidden_dim), jnp.float32, -lim1, lim1)
    b1 = jax.random.uniform(k2, (1, hidden_dim), jnp.float32, -lim1, lim1)
    w2 = jax.random.uniform(k3, (hidden_dim, out_dim), jnp.float32, -lim2, lim2)
    b2 = jax.random.uniform(k4, (1, out_dim), jnp.float32, -lim2, lim2)
    return w1, b1, w2, b2


def _ref(x, w1, b1, w2, b2):
    return jax.nn.sigmoid(jnp.maximum(x @ w1 + b1, 0.0) @ w2 + b2)


if __name__ == "__main__":
    key = jax.random.PRNGKey(0)
    k_x, k_x2, k_x3, k_p = jax.random.split(key, 4)

    in_dim, hidden_dim, out_dim = 32, 32, 3
    w1, b1, w2, b2 = init_params(k_p, in_dim, hidden_dim, out_dim)

    # Small batch (single block, heavy padding path).
    N = 8
    x = jax.random.normal(k_x, (N, in_dim), jnp.float32)
    out = jax.block_until_ready(color_mlp(x, w1, b1, w2, b2))
    ref = _ref(x, w1, b1, w2, b2)
    assert out.shape == (N, out_dim)
    # bf16 matmul operands -> looser tolerance vs. the f32 reference.
    assert jnp.allclose(out, ref, atol=2e-2), "mismatch vs reference (N=8)"

    # Ragged batch (N not a multiple of pack or 8).
    N2 = 37
    x2 = jax.random.normal(k_x2, (N2, in_dim), jnp.float32)
    out2 = jax.block_until_ready(color_mlp(x2, w1, b1, w2, b2))
    ref2 = _ref(x2, w1, b1, w2, b2)
    assert out2.shape == (N2, out_dim)
    assert jnp.allclose(out2, ref2, atol=2e-2), "mismatch vs reference (N=37)"

    # Multi-block grid path (small tile to force several grid steps).
    N3 = 1000
    x3 = jax.random.normal(k_x3, (N3, in_dim), jnp.float32)
    out3 = jax.block_until_ready(color_mlp(x3, w1, b1, w2, b2, tile_n=256))
    ref3 = _ref(x3, w1, b1, w2, b2)
    assert out3.shape == (N3, out_dim)
    assert jnp.allclose(out3, ref3, atol=2e-2), "mismatch vs reference (N=1000)"

    print("KERNEL_OK")
</pallas_src>

<mosaic_0001>
module attributes {stable_mosaic.version = 11 : i64} {
  func.func @_color_mlp_kernel(%arg0: i32, %arg1: memref<8x128xf32, #tpu.memory_space<vmem>>, %arg2: memref<128x128xbf16, #tpu.memory_space<vmem>>, %arg3: memref<1x128xf32, #tpu.memory_space<vmem>>, %arg4: memref<128x12xbf16, #tpu.memory_space<vmem>>, %arg5: memref<1x12xf32, #tpu.memory_space<vmem>>, %arg6: memref<8x12xf32, #tpu.memory_space<vmem>>) attributes {dimension_semantics = [#tpu.dimension_semantics<parallel>], iteration_bounds = array<i64: 1>, scalar_prefetch = 0 : i64, scratch_operands = 0 : i64, tpu.core_type = #tpu.core_type<tc>, window_params = [{transform_indices = @transform_0, window_bounds = array<i64: 8, 128>}, {pipeline_mode = #tpu.pipeline_mode<synchronous>, transform_indices = @transform_1, window_bounds = array<i64: 128, 128>}, {pipeline_mode = #tpu.pipeline_mode<synchronous>, transform_indices = @transform_2, window_bounds = array<i64: 1, 128>}, {pipeline_mode = #tpu.pipeline_mode<synchronous>, transform_indices = @transform_3, window_bounds = array<i64: 128, 12>}, {pipeline_mode = #tpu.pipeline_mode<synchronous>, transform_indices = @transform_4, window_bounds = array<i64: 1, 12>}, {transform_indices = @transform_5, window_bounds = array<i64: 8, 12>}]} {
    %c0 = arith.constant 0 : index
    %c0_0 = arith.constant 0 : index
    %0 = vector.load %arg1[%c0, %c0_0] : memref<8x128xf32, #tpu.memory_space<vmem>>, vector<8x128xf32>
    %1 = arith.truncf %0 : vector<8x128xf32> to vector<8x128xbf16>
    %c0_1 = arith.constant 0 : index
    %c0_2 = arith.constant 0 : index
    %2 = vector.load %arg2[%c0_1, %c0_2] : memref<128x128xbf16, #tpu.memory_space<vmem>>, vector<128x128xbf16>
    %cst = arith.constant dense<0.000000e+00> : vector<8x128xf32>
    %3 = tpu.matmul %1, %2, %cst {dimension_numbers = #tpu.dot_dimension_numbers<[1], [0], [0], [1], [0, 0, 1, 1], [], []>} : vector<8x128xbf16>, vector<128x128xbf16>, vector<8x128xf32> -> vector<8x128xf32>
    %c0_3 = arith.constant 0 : index
    %c0_4 = arith.constant 0 : index
    %4 = vector.load %arg3[%c0_3, %c0_4] : memref<1x128xf32, #tpu.memory_space<vmem>>, vector<1x128xf32>
    %5 = vector.broadcast %4 : vector<1x128xf32> to vector<8x128xf32>
    %6 = arith.addf %3, %5 : vector<8x128xf32>
    %cst_5 = arith.constant 0.000000e+00 : f32
    %7 = vector.broadcast %cst_5 : f32 to vector<8x128xf32>
    %8 = arith.maximumf %6, %7 : vector<8x128xf32>
    %9 = arith.truncf %8 : vector<8x128xf32> to vector<8x128xbf16>
    %c0_6 = arith.constant 0 : index
    %c0_7 = arith.constant 0 : index
    %10 = vector.load %arg4[%c0_6, %c0_7] : memref<128x12xbf16, #tpu.memory_space<vmem>>, vector<128x12xbf16>
    %cst_8 = arith.constant dense<0.000000e+00> : vector<8x12xf32>
    %11 = tpu.matmul %9, %10, %cst_8 {dimension_numbers = #tpu.dot_dimension_numbers<[1], [0], [0], [1], [0, 0, 1, 1], [], []>} : vector<8x128xbf16>, vector<128x12xbf16>, vector<8x12xf32> -> vector<8x12xf32>
    %c0_9 = arith.constant 0 : index
    %c0_10 = arith.constant 0 : index
    %12 = vector.load %arg5[%c0_9, %c0_10] : memref<1x12xf32, #tpu.memory_space<vmem>>, vector<1x12xf32>
    %13 = vector.broadcast %12 : vector<1x12xf32> to vector<8x12xf32>
    %14 = arith.addf %11, %13 : vector<8x12xf32>
    %15 = arith.negf %14 : vector<8x12xf32>
    %16 = math.exp %15 : vector<8x12xf32>
    %cst_11 = arith.constant 1.000000e+00 : f32
    %17 = vector.broadcast %cst_11 : f32 to vector<8x12xf32>
    %18 = arith.addf %17, %16 : vector<8x12xf32>
    %19 = arith.divf %17, %18 : vector<8x12xf32>
    %c0_12 = arith.constant 0 : index
    %c0_13 = arith.constant 0 : index
    %20 = vector.load %arg6[%c0_12, %c0_13] : memref<8x12xf32, #tpu.memory_space<vmem>>, vector<8x12xf32>
    tpu.vector_store %arg6[%c0_12, %c0_13], %19 {strides = array<i32>} : memref<8x12xf32, #tpu.memory_space<vmem>>, vector<8x12xf32>,
    return
  }
  func.func @transform_0(%arg0: i32) -> (i32, i32) {
    %c0_i32 = arith.constant 0 : i32
    %c0_i32_0 = arith.constant 0 : i32
    return %arg0, %c0_i32 : i32, i32
  }
  func.func @transform_1(%arg0: i32) -> (i32, i32) {
    %c0_i32 = arith.constant 0 : i32
    %c0_i32_0 = arith.constant 0 : i32
    %c0_i32_1 = arith.constant 0 : i32
    return %c0_i32, %c0_i32_0 : i32, i32
  }
  func.func @transform_2(%arg0: i32) -> (i32, i32) {
    %c0_i32 = arith.constant 0 : i32
    %c0_i32_0 = arith.constant 0 : i32
    %c0_i32_1 = arith.constant 0 : i32
    return %c0_i32, %c0_i32_0 : i32, i32
  }
  func.func @transform_3(%arg0: i32) -> (i32, i32) {
    %c0_i32 = arith.constant 0 : i32
    %c0_i32_0 = arith.constant 0 : i32
    %c0_i32_1 = arith.constant 0 : i32
    return %c0_i32, %c0_i32_0 : i32, i32
  }
  func.func @transform_4(%arg0: i32) -> (i32, i32) {
    %c0_i32 = arith.constant 0 : i32
    %c0_i32_0 = arith.constant 0 : i32
    %c0_i32_1 = arith.constant 0 : i32
    return %c0_i32, %c0_i32_0 : i32, i32
  }
  func.func @transform_5(%arg0: i32) -> (i32, i32) {
    %c0_i32 = arith.constant 0 : i32
    %c0_i32_0 = arith.constant 0 : i32
    return %arg0, %c0_i32 : i32, i32
  }
}

</mosaic_0001>

<llo_original>
// kernel: tpu_custom_call.1
$region0: #{tpu_custom_call.1}
  #allocation0 [shape = 'u32[]', space=smem, size = 0x4, offset = 0x4, fixed_abs, tag = 'smem constant byte address 0x4 - core index']
  #allocation1 [shape = 'u32[144,128]{1,0:T(1,128)}', space=vmem, size = 0x12000, scoped, tag = 'internal scratch']
  %s0 = inlined_call_operand.vmem [shape: f32[8,128], index: 0, kind: input, shape index: {}]
  %s1 = inlined_call_operand.vmem [shape: bf16[128,128], index: 1, kind: input, shape index: {}]
  %s2 = inlined_call_operand.vmem [shape: f32[1,128], index: 2, kind: input, shape index: {}]
  %s3 = inlined_call_operand.vmem [shape: bf16[128,12], index: 3, kind: input, shape index: {}]
  %s4 = inlined_call_operand.vmem [shape: f32[1,12], index: 4, kind: input, shape index: {}]
  %s5 = inlined_call_operand.hbm [shape: f32[8,12], index: 5, kind: output, shape index: {}]
  %s6 = sld [smem:[#allocation0]]
  $region30: #{tpu_custom_call.1} parent=0
    _
  %s8 = ssub.s32 1, %s6
  %s9 = scalar_select 0, %s8, %s6
  $region1: #{tpu_custom_call.1} parent=0
    #allocation2 [shape = 'u8[4096]{0}', space=vmem, size = 0x1000, scoped, tag = 'output window, operand 0, single buffered']
    #allocation3 [shape = 's32[1]{0}', space=sflag, size = 0x4, scoped, tag = 'scoped memory for tpu_custom_call.1']
    %10 = vsyncpa [#allocation3], 0
    // Predicated region
    $region2: #{tpu_custom_call.1} parent=1 // pred_check
      _
    $region3: #{tpu_custom_call.1} parent=1 // pred_check_branch
      %12 = sbr.rel (0) target = $region5
    $region4: #{tpu_custom_call.1} parent=1 // pred_region
      _
    $region5: #{tpu_custom_call.1} parent=1 // pred_fallthru
      _
    // Predicated region
    $region6: #{tpu_custom_call.1} parent=1 // pred_check
      _
    $region7: #{tpu_custom_call.1} parent=1 // pred_check_branch
      %14 = sbr.rel (0) target = $region9
    $region8: #{tpu_custom_call.1} parent=1 // pred_region
      _
    $region9: #{tpu_custom_call.1} parent=1 // pred_fallthru
      _
    // Predicated region
    $region10: #{tpu_custom_call.1} parent=1 // pred_check
      _
    $region11: #{tpu_custom_call.1} parent=1 // pred_check_branch
      %16 = sbr.rel (0) target = $region13
    $region12: #{tpu_custom_call.1} parent=1 // pred_region
      _
    $region13: #{tpu_custom_call.1} parent=1 // pred_fallthru
      _
    // Predicated region
    $region14: #{tpu_custom_call.1} parent=1 // pred_check
      _
    $region15: #{tpu_custom_call.1} parent=1 // pred_check_branch
      %18 = sbr.rel (0) target = $region17
    $region16: #{tpu_custom_call.1} parent=1 // pred_region
      _
    $region17: #{tpu_custom_call.1} parent=1 // pred_fallthru
      _
    // Predicated region
    $region18: #{tpu_custom_call.1} parent=1 // pred_check
      _
    $region19: #{tpu_custom_call.1} parent=1 // pred_check_branch
      %20 = sbr.rel (0) target = $region21
    $region20: #{tpu_custom_call.1} parent=1 // pred_region
      _
    $region21: #{tpu_custom_call.1} parent=1 // pred_fallthru
      _
    %v22 = vld [vmem:[%s0] sm:$0xff]
    %v23 = vpack.c.bf16 %v22, %v22
    %v24 = vld [vmem:[%s1] sm:$0xf]
    %v25 = vld [vmem:[%s1 + $0x4] sm:$0xf]
    %v26 = vld [vmem:[%s1 + $0x8] sm:$0xf]
    %v27 = vld [vmem:[%s1 + $0xc] sm:$0xf]
    %v28 = vld [vmem:[%s1 + $0x10] sm:$0xf]
    %v29 = vld [vmem:[%s1 + $0x14] sm:$0xf]
    %v30 = vld [vmem:[%s1 + $0x18] sm:$0xf]
    %v31 = vld [vmem:[%s1 + $0x1c] sm:$0xf]
    %v32 = vld [vmem:[%s1 + $0x20] sm:$0xf]
    %v33 = vld [vmem:[%s1 + $0x24] sm:$0xf]
    %v34 = vld [vmem:[%s1 + $0x28] sm:$0xf]
    %v35 = vld [vmem:[%s1 + $0x2c] sm:$0xf]
    %v36 = vld [vmem:[%s1 + $0x30] sm:$0xf]
    %v37 = vld [vmem:[%s1 + $0x34] sm:$0xf]
    %v38 = vld [vmem:[%s1 + $0x38] sm:$0xf]
    %v39 = vld [vmem:[%s1 + $0x3c] sm:$0xf]
    %v40 = vld [vmem:[%s2] sm:$0x1]
    %v42 = vlaneseq
    %v43 = vshrl.u32 %v42, 7
    %v44 = vsub.s32 0, %v43
    %v45 = vrot.slane %v40, %v44
    %v63 = vunpack.c.l.b16 %v24
    %v64 = vunpack.c.l.b16 %v25
    %v65 = vunpack.c.l.b16 %v26
    %v66 = vunpack.c.l.b16 %v27
    %v67 = vunpack.c.l.b16 %v28
    %v68 = vunpack.c.l.b16 %v29
    %v69 = vunpack.c.l.b16 %v30
    %v70 = vunpack.c.l.b16 %v31
    %v71 = vunpack.c.l.b16 %v32
    %v72 = vunpack.c.l.b16 %v33
    %v73 = vunpack.c.l.b16 %v34
    %v74 = vunpack.c.l.b16 %v35
    %v75 = vunpack.c.l.b16 %v36
    %v76 = vunpack.c.l.b16 %v37
    %v77 = vunpack.c.l.b16 %v38
    %v78 = vunpack.c.l.b16 %v39
    %v79 = vpack.c.b16 %v64, %v63
    %v80 = vpack.c.b16 %v66, %v65
    %v81 = vpack.c.b16 %v68, %v67
    %v82 = vpack.c.b16 %v70, %v69
    %v83 = vpack.c.b16 %v72, %v71
    %v84 = vpack.c.b16 %v74, %v73
    %v85 = vpack.c.b16 %v76, %v75
    %v86 = vpack.c.b16 %v78, %v77
    %95 = vmatprep.subr.bf16.mxu0 0
    %96 = vmatpush1.bf16.msra.mxu0 %v79
    %97 = vmatprep.subr.bf16.mxu0 0
    %98 = vmatpush1.bf16.msra.mxu0 %v80
    %99 = vmatprep.subr.bf16.mxu0 0
    %100 = vmatpush1.bf16.msra.mxu0 %v81
    %101 = vmatprep.subr.bf16.mxu0 0
    %102 = vmatpush1.bf16.msra.mxu0 %v82
    %103 = vmatprep.subr.bf16.mxu0 0
    %104 = vmatpush1.bf16.msra.mxu0 %v83
    %105 = vmatprep.subr.bf16.mxu0 0
    %106 = vmatpush1.bf16.msra.mxu0 %v84
    %107 = vmatprep.subr.bf16.mxu0 0
    %108 = vmatpush1.bf16.msra.mxu0 %v85
    %109 = vmatprep.subr.bf16.mxu0 0
    %110 = vmatpush1.bf16.msra.mxu0 %v86
    %111 = vmatprep.subr.bf16.mxu0 0
    %112 = vmatpush1.bf16.msra.mxu0 0
    %113 = vmatprep.subr.bf16.mxu0 0
    %114 = vmatpush1.bf16.msra.mxu0 0
    %115 = vmatprep.subr.bf16.mxu0 0
    %116 = vmatpush1.bf16.msra.mxu0 0
    %117 = vmatprep.subr.bf16.mxu0 0
    %118 = vmatpush1.bf16.msra.mxu0 0
    %119 = vmatprep.subr.bf16.mxu0 0
    %120 = vmatpush1.bf16.msra.mxu0 0
    %121 = vmatprep.subr.bf16.mxu0 0
    %122 = vmatpush1.bf16.msra.mxu0 0
    %123 = vmatprep.subr.bf16.mxu0 0
    %124 = vmatpush1.bf16.msra.mxu0 0
    %125 = vmatprep.subr.bf16.mxu0 0
    %126 = vmatpush1.bf16.msra.mxu0 0
    %127 = vmatprep.mubr.bf16.mxu0 0
    %128 = vmatmul.mubr.bf16.gmra.mrb[0].mxu0 %v23
    %v129 = vpop.f32.mrb[0].mxu0
    %v130 = vadd.f32 %v45, %v129
    %v131 = vpop.f32.mrb[0].mxu0
    %v132 = vpop.f32.mrb[0].mxu0
    %v133 = vpop.f32.mrb[0].mxu0
    %134 = vdwg.mxu0
    %v135 = vmax.f32 %v130, 0.0
    %v136 = vpack.c.bf16 %v135, %v135
    %v137 = vld [vmem:[%s3] sm:$0xf]
    %v138 = vld [vmem:[%s3 + $0x4] sm:$0xf]
    %v139 = vld [vmem:[%s3 + $0x8] sm:$0xf]
    %v140 = vld [vmem:[%s3 + $0xc] sm:$0xf]
    %v141 = vld [vmem:[%s3 + $0x10] sm:$0xf]
    %v142 = vld [vmem:[%s3 + $0x14] sm:$0xf]
    %v143 = vld [vmem:[%s3 + $0x18] sm:$0xf]
    %v144 = vld [vmem:[%s3 + $0x1c] sm:$0xf]
    %v145 = vld [vmem:[%s3 + $0x20] sm:$0xf]
    %v146 = vld [vmem:[%s3 + $0x24] sm:$0xf]
    %v147 = vld [vmem:[%s3 + $0x28] sm:$0xf]
    %v148 = vld [vmem:[%s3 + $0x2c] sm:$0xf]
    %v149 = vld [vmem:[%s3 + $0x30] sm:$0xf]
    %v150 = vld [vmem:[%s3 + $0x34] sm:$0xf]
    %v151 = vld [vmem:[%s3 + $0x38] sm:$0xf]
    %v152 = vld [vmem:[%s3 + $0x3c] sm:$0xf]
    %v153 = vld [vmem:[%s4] sm:$0x1]
    %v155 = vlaneseq
    %v156 = vshrl.u32 %v155, 7
    %v157 = vsub.s32 0, %v156
    %v158 = vrot.slane %v153, %v157
    %v176 = vunpack.c.l.b16 %v137
    %v177 = vunpack.c.l.b16 %v138
    %v178 = vunpack.c.l.b16 %v139
    %v179 = vunpack.c.l.b16 %v140
    %v180 = vunpack.c.l.b16 %v141
    %v181 = vunpack.c.l.b16 %v142
    %v182 = vunpack.c.l.b16 %v143
    %v183 = vunpack.c.l.b16 %v144
    %v184 = vunpack.c.l.b16 %v145
    %v185 = vunpack.c.l.b16 %v146
    %v186 = vunpack.c.l.b16 %v147
    %v187 = vunpack.c.l.b16 %v148
    %v188 = vunpack.c.l.b16 %v149
    %v189 = vunpack.c.l.b16 %v150
    %v190 = vunpack.c.l.b16 %v151
    %v191 = vunpack.c.l.b16 %v152
    %v192 = vpack.c.b16 %v177, %v176
    %v193 = vpack.c.b16 %v179, %v178
    %v194 = vpack.c.b16 %v181, %v180
    %v195 = vpack.c.b16 %v183, %v182
    %v196 = vpack.c.b16 %v185, %v184
    %v197 = vpack.c.b16 %v187, %v186
    %v198 = vpack.c.b16 %v189, %v188
    %v199 = vpack.c.b16 %v191, %v190
    %208 = vmatprep.subr.bf16.mxu0 0
    %209 = vmatpush1.bf16.msra.mxu0 %v192
    %210 = vmatprep.subr.bf16.mxu0 0
    %211 = vmatpush1.bf16.msra.mxu0 %v193
    %212 = vmatprep.subr.bf16.mxu0 0
    %213 = vmatpush1.bf16.msra.mxu0 %v194
    %214 = vmatprep.subr.bf16.mxu0 0
    %215 = vmatpush1.bf16.msra.mxu0 %v195
    %216 = vmatprep.subr.bf16.mxu0 0
    %217 = vmatpush1.bf16.msra.mxu0 %v196
    %218 = vmatprep.subr.bf16.mxu0 0
    %219 = vmatpush1.bf16.msra.mxu0 %v197
    %220 = vmatprep.subr.bf16.mxu0 0
    %221 = vmatpush1.bf16.msra.mxu0 %v198
    %222 = vmatprep.subr.bf16.mxu0 0
    %223 = vmatpush1.bf16.msra.mxu0 %v199
    %224 = vmatprep.subr.bf16.mxu0 0
    %225 = vmatpush1.bf16.msra.mxu0 0
    %226 = vmatprep.subr.bf16.mxu0 0
    %227 = vmatpush1.bf16.msra.mxu0 0
    %228 = vmatprep.subr.bf16.mxu0 0
    %229 = vmatpush1.bf16.msra.mxu0 0
    %230 = vmatprep.subr.bf16.mxu0 0
    %231 = vmatpush1.bf16.msra.mxu0 0
    %232 = vmatprep.subr.bf16.mxu0 0
    %233 = vmatpush1.bf16.msra.mxu0 0
    %234 = vmatprep.subr.bf16.mxu0 0
    %235 = vmatpush1.bf16.msra.mxu0 0
    %236 = vmatprep.subr.bf16.mxu0 0
    %237 = vmatpush1.bf16.msra.mxu0 0
    %238 = vmatprep.subr.bf16.mxu0 0
    %239 = vmatpush1.bf16.msra.mxu0 0
    %240 = vmatprep.mubr.bf16.mxu0 0
    %241 = vmatmul.mubr.bf16.gmra.mrb[0].mxu0 %v136
    %v242 = vpop.f32.mrb[0].mxu0
    %v243 = vadd.f32 %v158, %v242
    %v244 = vpop.f32.mrb[0].mxu0
    %v245 = vpop.f32.mrb[0].mxu0
    %v246 = vpop.f32.mrb[0].mxu0
    %247 = vdwg.mxu0
    %v248 = vxor.u32 %v243, 2147483648
    %v249 = vmul.f32 %v248, 1.442695
    %v250 = vpow.pop %v249
    %v251 = vadd.f32 %v250, 1.0
    %v252 = vrcp.pop %v251
    %v253 = vmul.f32 1.0, %v252
    %vm254 = vcmask 97280
    %255 = vst.msk [vmem:[#allocation2] sm:$0xff] %vm254, %v253
    // Predicated region
    $region22: #{tpu_custom_call.1} parent=1 // pred_check
      _
    $region23: #{tpu_custom_call.1} parent=1 // pred_check_branch
      %257 = sbr.rel (0) target = $region25
    $region24: #{tpu_custom_call.1} parent=1 // pred_region
      %s259 = ssub.s32 128, 128
      %260 = vsyncadd [#allocation3], %s259
      %s262 = sshll.u32 [#allocation2], 4
      %s263 = int_to_ptr.vmem [resolvable:$true] %s262
      %265 = dma.vmem_to_hbm [thread:$0]  %s263, 128, %s5, [#allocation3]
    $region25: #{tpu_custom_call.1} parent=1 // pred_fallthru
      _
    // Predicated region
    $region26: #{tpu_custom_call.1} parent=1 // pred_check
      _
    $region27: #{tpu_custom_call.1} parent=1 // pred_check_branch
      %267 = sbr.rel (0) target = $region29
    $region28: #{tpu_custom_call.1} parent=1 // pred_region
      %268 = dma.done [#allocation3], 128
    $region29: #{tpu_custom_call.1} parent=1 // pred_fallthru
      _
    %269 = vsyncpa [#allocation3], 1

</llo_original>
